<compile_context>
chip_gen: v7x
topology: tpu7x:2x2x1
jax: 0.10.0
libtpu: 0.0.40
codegen_flags: <defaults>
</compile_context>

<pallas_src>
import functools
import math

import jax
import jax.numpy as jnp
from jax.experimental import pallas as pl
from jax.experimental.pallas import tpu as pltpu


def _layernorm_kernel(x_ref, gamma_ref, beta_ref, o_ref, *, eps, inv_h):
    # x tile: (rows_tile, H); gamma/beta: (1, H), VMEM-resident across the grid.
    x = x_ref[...].astype(jnp.float32)
    mean = jnp.sum(x, axis=-1, keepdims=True) * inv_h
    centered = x - mean                                   # reused below (2-pass form)
    var = jnp.sum(centered * centered, axis=-1, keepdims=True) * inv_h
    inv = jax.lax.rsqrt(var + eps)                        # EUP rsqrt: near-free slot
    gamma = gamma_ref[...].astype(jnp.float32)
    beta = beta_ref[...].astype(jnp.float32)
    o_ref[...] = (centered * inv * gamma + beta).astype(o_ref.dtype)


def _layernorm_folded_kernel(x_ref, seg_ref, gamma_ref, beta_ref, o_ref, *, eps, inv_h, k):
    # Lane-dense small-H path: x tile is (rows_tile, W) with W = k*H a multiple of
    # 128; each wide row packs k logical rows. Per-segment moments via exact f32
    # masked reductions (k <= 4, statically unrolled).
    x = x_ref[...].astype(jnp.float32)
    seg = seg_ref[...]                                    # (1, W) int32: lane -> segment id
    masks = [seg == j for j in range(k)]                  # hoisted; reused for both passes

    mean_b = jnp.zeros_like(x)
    for j in range(k):
        s = jnp.sum(jnp.where(masks[j], x, 0.0), axis=-1, keepdims=True)   # (T, 1)
        mean_b = mean_b + jnp.where(masks[j], s * inv_h, 0.0)              # (T, W)

    centered = x - mean_b
    c2 = centered * centered
    var_b = jnp.zeros_like(x)
    for j in range(k):
        s = jnp.sum(jnp.where(masks[j], c2, 0.0), axis=-1, keepdims=True)
        var_b = var_b + jnp.where(masks[j], s * inv_h, 0.0)

    inv = jax.lax.rsqrt(var_b + eps)
    gamma = gamma_ref[...].astype(jnp.float32)
    beta = beta_ref[...].astype(jnp.float32)
    o_ref[...] = (centered * inv * gamma + beta).astype(o_ref.dtype)


def _sublane(itemsize):
    if itemsize >= 4:
        return 8
    if itemsize == 2:
        return 16
    return 32


def _vmem_capacity_bytes():
    try:
        cap = getattr(pltpu.get_tpu_info(), "vmem_capacity_bytes", None)
        if cap:
            return int(cap)
    except Exception:
        pass
    # Conservative fallback (safe on v7x which has 64 MiB per TensorCore).
    return 64 * 1024 * 1024


def _fold_factor(R, H):
    """Smallest k with (k*H) % 128 == 0; fold only if k <= 4 and k divides R."""
    if H % 128 == 0:
        return 1
    k = 128 // math.gcd(H, 128)
    if k <= 4 and R % k == 0:
        return k
    return 1


def _pick_rows_tile(R, W, itemsize, budget_bytes, target_block_bytes=8 << 20):
    """Rows per block: sized by bytes (~8 MiB input block), bounded by VMEM budget."""
    sub = _sublane(itemsize)
    if R <= sub:
        return R                                # single block equal to the full dim
    # Honest per-row VMEM estimate: 2x double-buffered input + 2x double-buffered
    # output (itemsize each) + ~3 f32 tile temporaries live in the body.
    bytes_per_row = max(W * (4 * itemsize + 3 * 4), 1)
    rows_vmem = budget_bytes // bytes_per_row
    rows_target = max(target_block_bytes // max(W * itemsize, 1), sub)
    rows = min(rows_vmem, rows_target)
    rows = max((int(rows) // sub) * sub, sub)
    r_up = ((R + sub - 1) // sub) * sub         # no point exceeding the row count
    return min(rows, r_up)


def layer_norm_sql(x, gamma, beta, variance_epsilon=1e-12, rows_tile=None):
    """LayerNormSQL forward. x: (..., H); gamma, beta: (H,)."""
    orig_shape = x.shape
    H = int(orig_shape[-1])
    x2 = x.reshape(-1, H)
    R = int(x2.shape[0])
    itemsize = jnp.dtype(x.dtype).itemsize
    sub = _sublane(itemsize)

    capacity = _vmem_capacity_bytes()
    vmem_limit = min(capacity - (16 << 20), 100 << 20)
    if capacity <= (64 << 20):                  # v7x-class: 64 MiB physical VMEM
        vmem_limit = min(vmem_limit, 48 << 20)
    vmem_limit = int(max(vmem_limit, 8 << 20))
    tile_budget = max(vmem_limit - (2 << 20), 1 << 20)

    eps = float(variance_epsilon)
    inv_h = 1.0 / float(H)
    k = _fold_factor(R, H)

    if k > 1:
        # Lane-dense small-H path: fold k logical rows per wide row (free reshape).
        W = k * H
        Rv = R // k
        x_view = x2.reshape(Rv, W)
        seg = (jnp.arange(W, dtype=jnp.int32) // H).reshape(1, W)
        gamma_v = jnp.tile(gamma.reshape(1, H), (1, k))
        beta_v = jnp.tile(beta.reshape(1, H), (1, k))
        kernel = functools.partial(_layernorm_folded_kernel, eps=eps, inv_h=inv_h, k=k)
        extra_inputs = (seg,)
        extra_specs = [pl.BlockSpec((1, W), lambda i: (0, 0))]     # seg: VMEM-resident
    else:
        W = H
        Rv = R
        x_view = x2
        gamma_v = gamma.reshape(1, H)
        beta_v = beta.reshape(1, H)
        kernel = functools.partial(_layernorm_kernel, eps=eps, inv_h=inv_h)
        extra_inputs = ()
        extra_specs = []

    if rows_tile is None:
        rt = _pick_rows_tile(Rv, W, itemsize, tile_budget)
    else:
        rt = int(rows_tile)
        if Rv > sub:
            rt = max((rt // sub) * sub, sub)
            rt = min(rt, ((Rv + sub - 1) // sub) * sub)
        else:
            rt = Rv

    grid = pl.cdiv(Rv, rt)                      # ragged last block handled by Pallas

    cost = pl.CostEstimate(
        flops=int(8 * R * H),
        transcendentals=int(R),
        bytes_accessed=int(2 * R * H * itemsize
                           + 2 * H * jnp.dtype(gamma.dtype).itemsize),
    )

    out = pl.pallas_call(
        kernel,
        out_shape=jax.ShapeDtypeStruct((Rv, W), x.dtype),
        grid_spec=pltpu.PrefetchScalarGridSpec(
            num_scalar_prefetch=0,
            grid=(grid,),
            in_specs=[pl.BlockSpec((rt, W), lambda i: (i, 0))]
                     + extra_specs
                     + [pl.BlockSpec((1, W), lambda i: (0, 0)),    # gamma: VMEM-resident
                        pl.BlockSpec((1, W), lambda i: (0, 0))],   # beta:  VMEM-resident
            out_specs=pl.BlockSpec((rt, W), lambda i: (i, 0)),
        ),
        compiler_params=pltpu.CompilerParams(
            dimension_semantics=("parallel",),
            vmem_limit_bytes=vmem_limit,
        ),
        cost_estimate=cost,
    )(x_view, *extra_inputs, gamma_v, beta_v)

    return out.reshape(orig_shape)


if __name__ == "__main__":
    key = jax.random.PRNGKey(0)
    k1, k2, k3, k4 = jax.random.split(key, 4)

    def ref_ln(x, gamma, beta, eps=1e-12):
        xf = x.astype(jnp.float32)
        u = jnp.mean(xf, axis=-1, keepdims=True)
        s = jnp.mean((xf - u) ** 2, axis=-1, keepdims=True)
        y = gamma.astype(jnp.float32) * ((xf - u) / jnp.sqrt(s + eps)) + beta.astype(jnp.float32)
        return y.astype(x.dtype)

    # Case 1: small hidden (H=32, non-zero mean) -> folded lane-dense path (W=128).
    x1 = jax.random.normal(k1, (2, 8, 32), dtype=jnp.float32) + 1.5
    g1 = jnp.ones((32,), jnp.float32)           # matches nn.Parameter(torch.ones(hS))
    b1 = jnp.zeros((32,), jnp.float32)          # matches nn.Parameter(torch.zeros(hS))
    y1 = jax.block_until_ready(layer_norm_sql(x1, g1, b1))
    assert jnp.allclose(y1, ref_ln(x1, g1, b1), atol=1e-5, rtol=1e-5), "mismatch (H=32 folded)"

    # Case 2: H=128 plain path with a ragged cdiv grid (R=18, rows_tile=8 -> 3 blocks).
    x2 = jax.random.normal(k2, (2, 9, 128), dtype=jnp.float32) * 2.0 - 1.0
    g2 = 1.0 + 0.1 * jax.random.normal(k3, (128,), dtype=jnp.float32)
    b2 = jnp.full((128,), 0.25, jnp.float32)
    y2 = jax.block_until_ready(layer_norm_sql(x2, g2, b2, rows_tile=8))
    assert jnp.allclose(y2, ref_ln(x2, g2, b2), atol=1e-5, rtol=1e-5), "mismatch (ragged grid)"

    # Case 3: bf16 inputs, H=256 plain path, ragged single block (R=28, tile 32).
    x3 = (jax.random.normal(k4, (4, 7, 256), dtype=jnp.float32) * 1.5).astype(jnp.bfloat16)
    g3 = jnp.ones((256,), jnp.bfloat16)
    b3 = jnp.zeros((256,), jnp.bfloat16)
    y3 = jax.block_until_ready(layer_norm_sql(x3, g3, b3))
    assert jnp.allclose(y3.astype(jnp.float32), ref_ln(x3, g3, b3).astype(jnp.float32),
                        atol=3e-2, rtol=3e-2), "mismatch (bf16)"

    print("KERNEL_OK")
</pallas_src>

<mosaic_0001>
module attributes {stable_mosaic.version = 11 : i64} {
  func.func @_layernorm_folded_kernel(%arg0: i32, %arg1: memref<4x128xf32, #tpu.memory_space<vmem>>, %arg2: memref<1x128xi32, #tpu.memory_space<vmem>>, %arg3: memref<1x128xf32, #tpu.memory_space<vmem>>, %arg4: memref<1x128xf32, #tpu.memory_space<vmem>>, %arg5: memref<4x128xf32, #tpu.memory_space<vmem>>) attributes {dimension_semantics = [#tpu.dimension_semantics<parallel>], iteration_bounds = array<i64: 1>, scalar_prefetch = 0 : i64, scratch_operands = 0 : i64, tpu.core_type = #tpu.core_type<tc>, window_params = [{transform_indices = @transform_0, window_bounds = array<i64: 4, 128>}, {pipeline_mode = #tpu.pipeline_mode<synchronous>, transform_indices = @transform_1, window_bounds = array<i64: 1, 128>}, {pipeline_mode = #tpu.pipeline_mode<synchronous>, transform_indices = @transform_2, window_bounds = array<i64: 1, 128>}, {pipeline_mode = #tpu.pipeline_mode<synchronous>, transform_indices = @transform_3, window_bounds = array<i64: 1, 128>}, {transform_indices = @transform_4, window_bounds = array<i64: 4, 128>}]} {
    %c0 = arith.constant 0 : index
    %c0_0 = arith.constant 0 : index
    %0 = vector.load %arg1[%c0, %c0_0] : memref<4x128xf32, #tpu.memory_space<vmem>>, vector<4x128xf32>
    %c0_1 = arith.constant 0 : index
    %c0_2 = arith.constant 0 : index
    %1 = vector.load %arg2[%c0_1, %c0_2] : memref<1x128xi32, #tpu.memory_space<vmem>>, vector<1x128xi32>
    %c0_i32 = arith.constant 0 : i32
    %2 = vector.broadcast %c0_i32 : i32 to vector<1x128xi32>
    %3 = arith.cmpi eq, %1, %2 : vector<1x128xi32>
    %c1_i32 = arith.constant 1 : i32
    %4 = vector.broadcast %c1_i32 : i32 to vector<1x128xi32>
    %5 = arith.cmpi eq, %1, %4 : vector<1x128xi32>
    %c2_i32 = arith.constant 2 : i32
    %6 = vector.broadcast %c2_i32 : i32 to vector<1x128xi32>
    %7 = arith.cmpi eq, %1, %6 : vector<1x128xi32>
    %c3_i32 = arith.constant 3 : i32
    %8 = vector.broadcast %c3_i32 : i32 to vector<1x128xi32>
    %9 = arith.cmpi eq, %1, %8 : vector<1x128xi32>
    %cst = arith.constant 0.000000e+00 : f32
    %10 = vector.broadcast %cst : f32 to vector<4x128xf32>
    %cst_3 = arith.constant 0.000000e+00 : f32
    %11 = vector.shape_cast %3 : vector<1x128xi1> to vector<1x128xi1>
    %12 = vector.broadcast %11 : vector<1x128xi1> to vector<4x128xi1>
    %13 = vector.broadcast %cst_3 : f32 to vector<4x128xf32>
    %14 = arith.select %12, %0, %13 : vector<4x128xi1>, vector<4x128xf32>
    %cst_4 = arith.constant dense<0.000000e+00> : vector<4xf32>
    %15 = vector.multi_reduction <add>, %14, %cst_4 [1] : vector<4x128xf32> to vector<4xf32>
    %16 = vector.shape_cast %15 : vector<4xf32> to vector<4x1xf32>
    %cst_5 = arith.constant 3.125000e-02 : f32
    %17 = vector.broadcast %cst_5 : f32 to vector<4x1xf32>
    %18 = arith.mulf %16, %17 : vector<4x1xf32>
    %cst_6 = arith.constant 0.000000e+00 : f32
    %19 = vector.shape_cast %3 : vector<1x128xi1> to vector<1x128xi1>
    %20 = vector.broadcast %19 : vector<1x128xi1> to vector<4x128xi1>
    %21 = vector.shape_cast %18 : vector<4x1xf32> to vector<4x1xf32>
    %22 = vector.broadcast %21 : vector<4x1xf32> to vector<4x128xf32>
    %23 = vector.broadcast %cst_6 : f32 to vector<4x128xf32>
    %24 = arith.select %20, %22, %23 : vector<4x128xi1>, vector<4x128xf32>
    %25 = arith.addf %10, %24 : vector<4x128xf32>
    %cst_7 = arith.constant 0.000000e+00 : f32
    %26 = vector.shape_cast %5 : vector<1x128xi1> to vector<1x128xi1>
    %27 = vector.broadcast %26 : vector<1x128xi1> to vector<4x128xi1>
    %28 = vector.broadcast %cst_7 : f32 to vector<4x128xf32>
    %29 = arith.select %27, %0, %28 : vector<4x128xi1>, vector<4x128xf32>
    %cst_8 = arith.constant dense<0.000000e+00> : vector<4xf32>
    %30 = vector.multi_reduction <add>, %29, %cst_8 [1] : vector<4x128xf32> to vector<4xf32>
    %31 = vector.shape_cast %30 : vector<4xf32> to vector<4x1xf32>
    %cst_9 = arith.constant 3.125000e-02 : f32
    %32 = vector.broadcast %cst_9 : f32 to vector<4x1xf32>
    %33 = arith.mulf %31, %32 : vector<4x1xf32>
    %cst_10 = arith.constant 0.000000e+00 : f32
    %34 = vector.shape_cast %5 : vector<1x128xi1> to vector<1x128xi1>
    %35 = vector.broadcast %34 : vector<1x128xi1> to vector<4x128xi1>
    %36 = vector.shape_cast %33 : vector<4x1xf32> to vector<4x1xf32>
    %37 = vector.broadcast %36 : vector<4x1xf32> to vector<4x128xf32>
    %38 = vector.broadcast %cst_10 : f32 to vector<4x128xf32>
    %39 = arith.select %35, %37, %38 : vector<4x128xi1>, vector<4x128xf32>
    %40 = arith.addf %25, %39 : vector<4x128xf32>
    %cst_11 = arith.constant 0.000000e+00 : f32
    %41 = vector.shape_cast %7 : vector<1x128xi1> to vector<1x128xi1>
    %42 = vector.broadcast %41 : vector<1x128xi1> to vector<4x128xi1>
    %43 = vector.broadcast %cst_11 : f32 to vector<4x128xf32>
    %44 = arith.select %42, %0, %43 : vector<4x128xi1>, vector<4x128xf32>
    %cst_12 = arith.constant dense<0.000000e+00> : vector<4xf32>
    %45 = vector.multi_reduction <add>, %44, %cst_12 [1] : vector<4x128xf32> to vector<4xf32>
    %46 = vector.shape_cast %45 : vector<4xf32> to vector<4x1xf32>
    %cst_13 = arith.constant 3.125000e-02 : f32
    %47 = vector.broadcast %cst_13 : f32 to vector<4x1xf32>
    %48 = arith.mulf %46, %47 : vector<4x1xf32>
    %cst_14 = arith.constant 0.000000e+00 : f32
    %49 = vector.shape_cast %7 : vector<1x128xi1> to vector<1x128xi1>
    %50 = vector.broadcast %49 : vector<1x128xi1> to vector<4x128xi1>
    %51 = vector.shape_cast %48 : vector<4x1xf32> to vector<4x1xf32>
    %52 = vector.broadcast %51 : vector<4x1xf32> to vector<4x128xf32>
    %53 = vector.broadcast %cst_14 : f32 to vector<4x128xf32>
    %54 = arith.select %50, %52, %53 : vector<4x128xi1>, vector<4x128xf32>
    %55 = arith.addf %40, %54 : vector<4x128xf32>
    %cst_15 = arith.constant 0.000000e+00 : f32
    %56 = vector.shape_cast %9 : vector<1x128xi1> to vector<1x128xi1>
    %57 = vector.broadcast %56 : vector<1x128xi1> to vector<4x128xi1>
    %58 = vector.broadcast %cst_15 : f32 to vector<4x128xf32>
    %59 = arith.select %57, %0, %58 : vector<4x128xi1>, vector<4x128xf32>
    %cst_16 = arith.constant dense<0.000000e+00> : vector<4xf32>
    %60 = vector.multi_reduction <add>, %59, %cst_16 [1] : vector<4x128xf32> to vector<4xf32>
    %61 = vector.shape_cast %60 : vector<4xf32> to vector<4x1xf32>
    %cst_17 = arith.constant 3.125000e-02 : f32
    %62 = vector.broadcast %cst_17 : f32 to vector<4x1xf32>
    %63 = arith.mulf %61, %62 : vector<4x1xf32>
    %cst_18 = arith.constant 0.000000e+00 : f32
    %64 = vector.shape_cast %9 : vector<1x128xi1> to vector<1x128xi1>
    %65 = vector.broadcast %64 : vector<1x128xi1> to vector<4x128xi1>
    %66 = vector.shape_cast %63 : vector<4x1xf32> to vector<4x1xf32>
    %67 = vector.broadcast %66 : vector<4x1xf32> to vector<4x128xf32>
    %68 = vector.broadcast %cst_18 : f32 to vector<4x128xf32>
    %69 = arith.select %65, %67, %68 : vector<4x128xi1>, vector<4x128xf32>
    %70 = arith.addf %55, %69 : vector<4x128xf32>
    %71 = arith.subf %0, %70 : vector<4x128xf32>
    %72 = arith.mulf %71, %71 : vector<4x128xf32>
    %cst_19 = arith.constant 0.000000e+00 : f32
    %73 = vector.broadcast %cst_19 : f32 to vector<4x128xf32>
    %cst_20 = arith.constant 0.000000e+00 : f32
    %74 = vector.shape_cast %3 : vector<1x128xi1> to vector<1x128xi1>
    %75 = vector.broadcast %74 : vector<1x128xi1> to vector<4x128xi1>
    %76 = vector.broadcast %cst_20 : f32 to vector<4x128xf32>
    %77 = arith.select %75, %72, %76 : vector<4x128xi1>, vector<4x128xf32>
    %cst_21 = arith.constant dense<0.000000e+00> : vector<4xf32>
    %78 = vector.multi_reduction <add>, %77, %cst_21 [1] : vector<4x128xf32> to vector<4xf32>
    %79 = vector.shape_cast %78 : vector<4xf32> to vector<4x1xf32>
    %cst_22 = arith.constant 3.125000e-02 : f32
    %80 = vector.broadcast %cst_22 : f32 to vector<4x1xf32>
    %81 = arith.mulf %79, %80 : vector<4x1xf32>
    %cst_23 = arith.constant 0.000000e+00 : f32
    %82 = vector.shape_cast %3 : vector<1x128xi1> to vector<1x128xi1>
    %83 = vector.broadcast %82 : vector<1x128xi1> to vector<4x128xi1>
    %84 = vector.shape_cast %81 : vector<4x1xf32> to vector<4x1xf32>
    %85 = vector.broadcast %84 : vector<4x1xf32> to vector<4x128xf32>
    %86 = vector.broadcast %cst_23 : f32 to vector<4x128xf32>
    %87 = arith.select %83, %85, %86 : vector<4x128xi1>, vector<4x128xf32>
    %88 = arith.addf %73, %87 : vector<4x128xf32>
    %cst_24 = arith.constant 0.000000e+00 : f32
    %89 = vector.shape_cast %5 : vector<1x128xi1> to vector<1x128xi1>
    %90 = vector.broadcast %89 : vector<1x128xi1> to vector<4x128xi1>
    %91 = vector.broadcast %cst_24 : f32 to vector<4x128xf32>
    %92 = arith.select %90, %72, %91 : vector<4x128xi1>, vector<4x128xf32>
    %cst_25 = arith.constant dense<0.000000e+00> : vector<4xf32>
    %93 = vector.multi_reduction <add>, %92, %cst_25 [1] : vector<4x128xf32> to vector<4xf32>
    %94 = vector.shape_cast %93 : vector<4xf32> to vector<4x1xf32>
    %cst_26 = arith.constant 3.125000e-02 : f32
    %95 = vector.broadcast %cst_26 : f32 to vector<4x1xf32>
    %96 = arith.mulf %94, %95 : vector<4x1xf32>
    %cst_27 = arith.constant 0.000000e+00 : f32
    %97 = vector.shape_cast %5 : vector<1x128xi1> to vector<1x128xi1>
    %98 = vector.broadcast %97 : vector<1x128xi1> to vector<4x128xi1>
    %99 = vector.shape_cast %96 : vector<4x1xf32> to vector<4x1xf32>
    %100 = vector.broadcast %99 : vector<4x1xf32> to vector<4x128xf32>
    %101 = vector.broadcast %cst_27 : f32 to vector<4x128xf32>
    %102 = arith.select %98, %100, %101 : vector<4x128xi1>, vector<4x128xf32>
    %103 = arith.addf %88, %102 : vector<4x128xf32>
    %cst_28 = arith.constant 0.000000e+00 : f32
    %104 = vector.shape_cast %7 : vector<1x128xi1> to vector<1x128xi1>
    %105 = vector.broadcast %104 : vector<1x128xi1> to vector<4x128xi1>
    %106 = vector.broadcast %cst_28 : f32 to vector<4x128xf32>
    %107 = arith.select %105, %72, %106 : vector<4x128xi1>, vector<4x128xf32>
    %cst_29 = arith.constant dense<0.000000e+00> : vector<4xf32>
    %108 = vector.multi_reduction <add>, %107, %cst_29 [1] : vector<4x128xf32> to vector<4xf32>
    %109 = vector.shape_cast %108 : vector<4xf32> to vector<4x1xf32>
    %cst_30 = arith.constant 3.125000e-02 : f32
    %110 = vector.broadcast %cst_30 : f32 to vector<4x1xf32>
    %111 = arith.mulf %109, %110 : vector<4x1xf32>
    %cst_31 = arith.constant 0.000000e+00 : f32
    %112 = vector.shape_cast %7 : vector<1x128xi1> to vector<1x128xi1>
    %113 = vector.broadcast %112 : vector<1x128xi1> to vector<4x128xi1>
    %114 = vector.shape_cast %111 : vector<4x1xf32> to vector<4x1xf32>
    %115 = vector.broadcast %114 : vector<4x1xf32> to vector<4x128xf32>
    %116 = vector.broadcast %cst_31 : f32 to vector<4x128xf32>
    %117 = arith.select %113, %115, %116 : vector<4x128xi1>, vector<4x128xf32>
    %118 = arith.addf %103, %117 : vector<4x128xf32>
    %cst_32 = arith.constant 0.000000e+00 : f32
    %119 = vector.shape_cast %9 : vector<1x128xi1> to vector<1x128xi1>
    %120 = vector.broadcast %119 : vector<1x128xi1> to vector<4x128xi1>
    %121 = vector.broadcast %cst_32 : f32 to vector<4x128xf32>
    %122 = arith.select %120, %72, %121 : vector<4x128xi1>, vector<4x128xf32>
    %cst_33 = arith.constant dense<0.000000e+00> : vector<4xf32>
    %123 = vector.multi_reduction <add>, %122, %cst_33 [1] : vector<4x128xf32> to vector<4xf32>
    %124 = vector.shape_cast %123 : vector<4xf32> to vector<4x1xf32>
    %cst_34 = arith.constant 3.125000e-02 : f32
    %125 = vector.broadcast %cst_34 : f32 to vector<4x1xf32>
    %126 = arith.mulf %124, %125 : vector<4x1xf32>
    %cst_35 = arith.constant 0.000000e+00 : f32
    %127 = vector.shape_cast %9 : vector<1x128xi1> to vector<1x128xi1>
    %128 = vector.broadcast %127 : vector<1x128xi1> to vector<4x128xi1>
    %129 = vector.shape_cast %126 : vector<4x1xf32> to vector<4x1xf32>
    %130 = vector.broadcast %129 : vector<4x1xf32> to vector<4x128xf32>
    %131 = vector.broadcast %cst_35 : f32 to vector<4x128xf32>
    %132 = arith.select %128, %130, %131 : vector<4x128xi1>, vector<4x128xf32>
    %133 = arith.addf %118, %132 : vector<4x128xf32>
    %cst_36 = arith.constant 9.99999996E-13 : f32
    %134 = vector.broadcast %cst_36 : f32 to vector<4x128xf32>
    %135 = arith.addf %133, %134 : vector<4x128xf32>
    %136 = math.rsqrt %135 : vector<4x128xf32>
    %c0_37 = arith.constant 0 : index
    %c0_38 = arith.constant 0 : index
    %137 = vector.load %arg3[%c0_37, %c0_38] : memref<1x128xf32, #tpu.memory_space<vmem>>, vector<1x128xf32>
    %c0_39 = arith.constant 0 : index
    %c0_40 = arith.constant 0 : index
    %138 = vector.load %arg4[%c0_39, %c0_40] : memref<1x128xf32, #tpu.memory_space<vmem>>, vector<1x128xf32>
    %139 = arith.mulf %71, %136 : vector<4x128xf32>
    %140 = vector.broadcast %137 : vector<1x128xf32> to vector<4x128xf32>
    %141 = arith.mulf %139, %140 : vector<4x128xf32>
    %142 = vector.broadcast %138 : vector<1x128xf32> to vector<4x128xf32>
    %143 = arith.addf %141, %142 : vector<4x128xf32>
    %c0_41 = arith.constant 0 : index
    %c0_42 = arith.constant 0 : index
    %144 = vector.load %arg5[%c0_41, %c0_42] : memref<4x128xf32, #tpu.memory_space<vmem>>, vector<4x128xf32>
    tpu.vector_store %arg5[%c0_41, %c0_42], %143 {strides = array<i32>} : memref<4x128xf32, #tpu.memory_space<vmem>>, vector<4x128xf32>,
    return
  }
  func.func @transform_0(%arg0: i32) -> (i32, i32) {
    %c0_i32 = arith.constant 0 : i32
    %c0_i32_0 = arith.constant 0 : i32
    return %arg0, %c0_i32 : i32, i32
  }
  func.func @transform_1(%arg0: i32) -> (i32, i32) {
    %c0_i32 = arith.constant 0 : i32
    %c0_i32_0 = arith.constant 0 : i32
    %c0_i32_1 = arith.constant 0 : i32
    return %c0_i32, %c0_i32_0 : i32, i32
  }
  func.func @transform_2(%arg0: i32) -> (i32, i32) {
    %c0_i32 = arith.constant 0 : i32
    %c0_i32_0 = arith.constant 0 : i32
    %c0_i32_1 = arith.constant 0 : i32
    return %c0_i32, %c0_i32_0 : i32, i32
  }
  func.func @transform_3(%arg0: i32) -> (i32, i32) {
    %c0_i32 = arith.constant 0 : i32
    %c0_i32_0 = arith.constant 0 : i32
    %c0_i32_1 = arith.constant 0 : i32
    return %c0_i32, %c0_i32_0 : i32, i32
  }
  func.func @transform_4(%arg0: i32) -> (i32, i32) {
    %c0_i32 = arith.constant 0 : i32
    %c0_i32_0 = arith.constant 0 : i32
    return %arg0, %c0_i32 : i32, i32
  }
}

</mosaic_0001>

<llo_original>
// kernel: tpu_custom_call.1
$region0: #{tpu_custom_call.1}
  #allocation0 [shape = 'u32[]', space=smem, size = 0x4, offset = 0x4, fixed_abs, tag = 'smem constant byte address 0x4 - core index']
  #allocation1 [shape = 'u32[144,128]{1,0:T(1,128)}', space=vmem, size = 0x12000, scoped, tag = 'internal scratch']
  %s0 = inlined_call_operand.hbm [shape: f32[4,128], index: 0, kind: input, shape index: {}]
  %s1 = inlined_call_operand.vmem [shape: s32[1,128], index: 1, kind: input, shape index: {}]
  %s2 = inlined_call_operand.vmem [shape: f32[1,128], index: 2, kind: input, shape index: {}]
  %s3 = inlined_call_operand.vmem [shape: f32[1,128], index: 3, kind: input, shape index: {}]
  %s4 = inlined_call_operand.hbm [shape: f32[4,128], index: 4, kind: output, shape index: {}]
  %s5 = sld [smem:[#allocation0]]
  $region30: #{tpu_custom_call.1} parent=0
    _
  %s7 = ssub.s32 1, %s5
  %s8 = scalar_select 0, %s7, %s5
  $region1: #{tpu_custom_call.1} parent=0
    #allocation2 [shape = 'u8[2048]{0}', space=vmem, size = 0x800, scoped, tag = 'input window, operand 0, single buffered']
    #allocation3 [shape = 's32[1]{0}', space=sflag, size = 0x4, scoped, tag = 'scoped memory for tpu_custom_call.1']
    #allocation4 [shape = 's32[1]{0}', space=sflag, size = 0x4, scoped, tag = 'scoped memory for tpu_custom_call.1']
    #allocation5 [shape = 'u8[2048]{0}', space=vmem, size = 0x800, scoped, tag = 'output window, operand 0, single buffered']
    %9 = vsyncpa [#allocation3], 0
    %10 = vsyncpa [#allocation4], 0
    // Predicated region
    $region2: #{tpu_custom_call.1} parent=1 // pred_check
      _
    $region3: #{tpu_custom_call.1} parent=1 // pred_check_branch
      %12 = sbr.rel (0) target = $region5
    $region4: #{tpu_custom_call.1} parent=1 // pred_region
      %s14 = ssub.s32 64, 64
      %15 = vsyncadd [#allocation3], %s14
      %s17 = sshll.u32 [#allocation2], 4
      %s18 = int_to_ptr.vmem [resolvable:$true] %s17
      %20 = dma.hbm_to_vmem [thread:$0]  %s0, 64, %s18, [#allocation3]
    $region5: #{tpu_custom_call.1} parent=1 // pred_fallthru
      _
    // Predicated region
    $region6: #{tpu_custom_call.1} parent=1 // pred_check
      _
    $region7: #{tpu_custom_call.1} parent=1 // pred_check_branch
      %22 = sbr.rel (0) target = $region9
    $region8: #{tpu_custom_call.1} parent=1 // pred_region
      _
    $region9: #{tpu_custom_call.1} parent=1 // pred_fallthru
      _
    // Predicated region
    $region10: #{tpu_custom_call.1} parent=1 // pred_check
      _
    $region11: #{tpu_custom_call.1} parent=1 // pred_check_branch
      %24 = sbr.rel (0) target = $region13
    $region12: #{tpu_custom_call.1} parent=1 // pred_region
      _
    $region13: #{tpu_custom_call.1} parent=1 // pred_fallthru
      _
    // Predicated region
    $region14: #{tpu_custom_call.1} parent=1 // pred_check
      _
    $region15: #{tpu_custom_call.1} parent=1 // pred_check_branch
      %26 = sbr.rel (0) target = $region17
    $region16: #{tpu_custom_call.1} parent=1 // pred_region
      _
    $region17: #{tpu_custom_call.1} parent=1 // pred_fallthru
      _
    // Predicated region
    $region18: #{tpu_custom_call.1} parent=1 // pred_check
      _
    $region19: #{tpu_custom_call.1} parent=1 // pred_check_branch
      %28 = sbr.rel (0) target = $region21
    $region20: #{tpu_custom_call.1} parent=1 // pred_region
      %29 = dma.done [#allocation3], 64
    $region21: #{tpu_custom_call.1} parent=1 // pred_fallthru
      _
    %v30 = vld [vmem:[#allocation2] sm:$0xf]
    %v31 = vld [vmem:[%s1] sm:$0x1]
    %vm32 = vcmp.eq.s32.totalorder %v31, 0
    %vm33 = vcmp.eq.s32.totalorder %v31, 1
    %vm34 = vcmp.eq.s32.totalorder %v31, 2
    %vm35 = vcmp.eq.s32.totalorder %v31, 3
    %v36 = vsel %vm32, 1, 0
    %v37 = vlaneseq
    %v38 = vshrl.u32 %v37, 7
    %v39 = vsub.s32 0, %v38
    %v40 = vrot.slane %v36, %v39
    %vm41 = vcmp.eq.s32.totalorder %v40, 1
    %v42 = vsel %vm41, %v30, 0.0
    %vm43 = vcmask 1043456
    %v44 = vsel %vm43, %v42, 0.0
    %45 = vadd.xlane.f32.xlu0 %v44
    %v46 = vpop.xlane.xlu0 %45
    %v47 = vmul.f32 %v46, 0.03125
    %v48 = vsel %vm41, %v47, 0.0
    %v49 = vadd.f32 %v48, 0.0
    %v50 = vsel %vm33, 1, 0
    %v51 = vlaneseq
    %v52 = vshrl.u32 %v51, 7
    %v53 = vsub.s32 0, %v52
    %v54 = vrot.slane %v50, %v53
    %vm55 = vcmp.eq.s32.totalorder %v54, 1
    %v56 = vsel %vm55, %v30, 0.0
    %v57 = vsel %vm43, %v56, 0.0
    %58 = vadd.xlane.f32.xlu0 %v57
    %v59 = vpop.xlane.xlu0 %58
    %v60 = vmul.f32 %v59, 0.03125
    %v61 = vsel %vm55, %v60, 0.0
    %v62 = vadd.f32 %v49, %v61
    %v63 = vsel %vm34, 1, 0
    %v64 = vlaneseq
    %v65 = vshrl.u32 %v64, 7
    %v66 = vsub.s32 0, %v65
    %v67 = vrot.slane %v63, %v66
    %vm68 = vcmp.eq.s32.totalorder %v67, 1
    %v69 = vsel %vm68, %v30, 0.0
    %v70 = vsel %vm43, %v69, 0.0
    %71 = vadd.xlane.f32.xlu0 %v70
    %v72 = vpop.xlane.xlu0 %71
    %v73 = vmul.f32 %v72, 0.03125
    %v74 = vsel %vm68, %v73, 0.0
    %v75 = vadd.f32 %v62, %v74
    %v76 = vsel %vm35, 1, 0
    %v77 = vlaneseq
    %v78 = vshrl.u32 %v77, 7
    %v79 = vsub.s32 0, %v78
    %v80 = vrot.slane %v76, %v79
    %vm81 = vcmp.eq.s32.totalorder %v80, 1
    %v82 = vsel %vm81, %v30, 0.0
    %v83 = vsel %vm43, %v82, 0.0
    %84 = vadd.xlane.f32.xlu0 %v83
    %v85 = vpop.xlane.xlu0 %84
    %v86 = vmul.f32 %v85, 0.03125
    %v87 = vsel %vm81, %v86, 0.0
    %v88 = vadd.f32 %v75, %v87
    %v89 = vsub.f32 %v30, %v88
    %v90 = vmul.f32 %v89, %v89
    %v91 = vsel %vm41, %v90, 0.0
    %v92 = vsel %vm43, %v91, 0.0
    %93 = vadd.xlane.f32.xlu0 %v92
    %v94 = vpop.xlane.xlu0 %93
    %v95 = vmul.f32 %v94, 0.03125
    %v96 = vsel %vm41, %v95, 0.0
    %v97 = vadd.f32 %v96, 0.0
    %v98 = vsel %vm55, %v90, 0.0
    %v99 = vsel %vm43, %v98, 0.0
    %100 = vadd.xlane.f32.xlu0 %v99
    %v101 = vpop.xlane.xlu0 %100
    %v102 = vmul.f32 %v101, 0.03125
    %v103 = vsel %vm55, %v102, 0.0
    %v104 = vadd.f32 %v97, %v103
    %v105 = vsel %vm68, %v90, 0.0
    %v106 = vsel %vm43, %v105, 0.0
    %107 = vadd.xlane.f32.xlu0 %v106
    %v108 = vpop.xlane.xlu0 %107
    %v109 = vmul.f32 %v108, 0.03125
    %v110 = vsel %vm68, %v109, 0.0
    %v111 = vadd.f32 %v104, %v110
    %v112 = vsel %vm81, %v90, 0.0
    %v113 = vsel %vm43, %v112, 0.0
    %114 = vadd.xlane.f32.xlu0 %v113
    %v115 = vpop.xlane.xlu0 %114
    %v116 = vmul.f32 %v115, 0.03125
    %v117 = vsel %vm81, %v116, 0.0
    %v118 = vadd.f32 %v111, %v117
    %v119 = vadd.f32 %v118, 1e-12
    %v120 = vrsqrt.pop %v119
    %v121 = vld [vmem:[%s2] sm:$0x1]
    %v122 = vld [vmem:[%s3] sm:$0x1]
    %v123 = vmul.f32 %v89, %v120
    %v125 = vlaneseq
    %v126 = vshrl.u32 %v125, 7
    %v127 = vsub.s32 0, %v126
    %v128 = vrot.slane %v121, %v127
    %v130 = vmul.f32 %v123, %v128
    %v132 = vlaneseq
    %v133 = vshrl.u32 %v132, 7
    %v134 = vsub.s32 0, %v133
    %v135 = vrot.slane %v122, %v134
    %v137 = vadd.f32 %v130, %v135
    %138 = vst [vmem:[#allocation5] sm:$0xf] %v137
    // Predicated region
    $region22: #{tpu_custom_call.1} parent=1 // pred_check
      _
    $region23: #{tpu_custom_call.1} parent=1 // pred_check_branch
      %140 = sbr.rel (0) target = $region25
    $region24: #{tpu_custom_call.1} parent=1 // pred_region
      %s142 = ssub.s32 64, 64
      %143 = vsyncadd [#allocation4], %s142
      %s145 = sshll.u32 [#allocation5], 4
      %s146 = int_to_ptr.vmem [resolvable:$true] %s145
      %148 = dma.vmem_to_hbm [thread:$0]  %s146, 64, %s4, [#allocation4]
    $region25: #{tpu_custom_call.1} parent=1 // pred_fallthru
      _
    // Predicated region
    $region26: #{tpu_custom_call.1} parent=1 // pred_check
      _
    $region27: #{tpu_custom_call.1} parent=1 // pred_check_branch
      %150 = sbr.rel (0) target = $region29
    $region28: #{tpu_custom_call.1} parent=1 // pred_region
      %151 = dma.done [#allocation4], 64
    $region29: #{tpu_custom_call.1} parent=1 // pred_fallthru
      _
    %152 = vsyncpa [#allocation3], 1
    %153 = vsyncpa [#allocation4], 1

</llo_original>
